<compile_context>
chip_gen: v5e
topology: v5e:2x2
jax: 0.10.0
libtpu: 0.0.40
codegen_flags: <defaults>
</compile_context>

<pallas_src>
import functools

import jax
import jax.numpy as jnp
from jax.experimental import pallas as pl
from jax.experimental.pallas import tpu as pltpu

_LANE_CHOICES = (1024, 512, 256, 128)


def _round_up(x, m):
    return ((x + m - 1) // m) * m


def _drop_path_kernel(scale_ref, x_ref, o_ref):
    # scale_ref: (N,) float32 in SMEM (scalar prefetch): mask_b / keep_prob.
    # x_ref / o_ref: (1, tr, lanes) VMEM tiles.
    b = pl.program_id(0)
    o_ref[...] = x_ref[...] * scale_ref[b].astype(o_ref.dtype)


def drop_path(x, drop_prob: float = 0.0, training: bool = False, *, key=None,
              block_rows: int = 4096, min_pallas_elems: int = 1 << 17):
    """Stochastic depth.  Matches torch: x / keep_prob * floor(keep_prob + U[0,1))."""
    if drop_prob == 0.0 or not training:
        return x
    if key is None:
        raise ValueError("drop_path needs a PRNG key when training with drop_prob > 0")

    keep_prob = 1.0 - float(drop_prob)
    n_batch = int(x.shape[0])
    feat = 1
    for d in x.shape[1:]:
        feat *= int(d)
    total = n_batch * feat

    # Per-sample Bernoulli(keep_prob) mask, same construction as the torch code.
    # TODO(synk): torch.rand's RNG stream cannot be reproduced bit-for-bit; the
    # keep mask uses jax.random.uniform (distribution-identical Bernoulli).
    u = jax.random.uniform(key, (n_batch,), dtype=jnp.float32)
    keep_mask = jnp.floor(keep_prob + u)                       # 0.0 or 1.0 per sample
    scale = keep_mask * jnp.float32(1.0 / keep_prob)           # (N,) float32

    # Fallback: tiny tensors (let XLA fuse) or feature size not lane-divisible.
    if total < min_pallas_elems or feat % 128 != 0:
        s = scale.astype(x.dtype).reshape((n_batch,) + (1,) * (x.ndim - 1))
        return x * s

    # Widest lane-dense view of the per-sample features.
    lanes = 128
    for cand in _LANE_CHOICES:
        if feat % cand == 0:
            lanes = cand
            break
    rows = feat // lanes
    x3 = x.reshape(n_batch, rows, lanes)

    # Tile rows: multiple of 8 sublanes, ~block_rows*128 elements per block
    # (~2 MiB f32).  Partial last block handled by Pallas masked stores.
    target_rows = max(8, _round_up((int(block_rows) * 128) // lanes, 8))
    tr = min(target_rows, _round_up(rows, 8))
    grid = (n_batch, pl.cdiv(rows, tr))

    out3 = pl.pallas_call(
        _drop_path_kernel,
        out_shape=jax.ShapeDtypeStruct((n_batch, rows, lanes), x.dtype),
        grid_spec=pltpu.PrefetchScalarGridSpec(
            num_scalar_prefetch=1,
            grid=grid,
            in_specs=[pl.BlockSpec((1, tr, lanes), lambda b, r, s: (b, r, 0))],
            out_specs=pl.BlockSpec((1, tr, lanes), lambda b, r, s: (b, r, 0)),
        ),
        compiler_params=pltpu.CompilerParams(
            dimension_semantics=("parallel", "parallel")),
        cost_estimate=pl.CostEstimate(
            flops=total,
            transcendentals=0,
            bytes_accessed=2 * total * x.dtype.itemsize),
    )(scale, x3)

    return out3.reshape(x.shape)


class DropPath:
    """Mirror of the PyTorch module."""

    def __init__(self, drop_prob=None):
        self.drop_prob = 0.0 if drop_prob is None else float(drop_prob)
        self.training = True

    def __call__(self, x, *, key=None, **kwargs):
        return drop_path(x, self.drop_prob, self.training, key=key, **kwargs)


def _reference_drop_path(x, drop_prob, key):
    """Pure-JAX reference, same mask draw as the wrapper."""
    keep_prob = 1.0 - drop_prob
    u = jax.random.uniform(key, (x.shape[0],), dtype=jnp.float32)
    mask = jnp.floor(keep_prob + u).astype(x.dtype)
    shape = (x.shape[0],) + (1,) * (x.ndim - 1)
    return (x / keep_prob) * mask.reshape(shape)


if __name__ == "__main__":
    root = jax.random.PRNGKey(0)
    kx, kmask1, kmask2 = jax.random.split(root, 3)

    drop_prob = 0.25

    # Small NCHW example (2,4,16,16); force the Pallas path even though it is tiny.
    x = jax.random.normal(kx, (2, 4, 16, 16), dtype=jnp.float32)
    out = drop_path(x, drop_prob, True, key=kmask1, min_pallas_elems=0)
    jax.block_until_ready(out)
    ref = _reference_drop_path(x, drop_prob, kmask1)
    assert out.shape == x.shape
    assert jnp.allclose(out, ref, rtol=1e-5, atol=1e-5), float(jnp.max(jnp.abs(out - ref)))

    # Identity paths: eval mode and drop_prob == 0 return x untouched (no kernel).
    assert drop_path(x, drop_prob, False) is x
    assert drop_path(x, 0.0, True) is x

    # Larger input exercising the default (multi-MiB-block) tiling and megacore grid.
    xb = jax.random.normal(kx, (8, 64, 64, 64), dtype=jnp.float32)
    outb = drop_path(xb, drop_prob, True, key=kmask2)
    jax.block_until_ready(outb)
    refb = _reference_drop_path(xb, drop_prob, kmask2)
    assert jnp.allclose(outb, refb, rtol=1e-5, atol=1e-5), float(jnp.max(jnp.abs(outb - refb)))

    # Ragged row count (feat = 3*40*16 = 1920 -> 15 lane-rows at 128 lanes):
    # partial block, no jnp.pad / slice copies in the wrapper.
    xr = jax.random.normal(kx, (4, 3, 40, 16), dtype=jnp.float32)
    outr = drop_path(xr, drop_prob, True, key=kmask1, min_pallas_elems=0)
    jax.block_until_ready(outr)
    refr = _reference_drop_path(xr, drop_prob, kmask1)
    assert jnp.allclose(outr, refr, rtol=1e-5, atol=1e-5), float(jnp.max(jnp.abs(outr - refr)))

    # bf16 path (compute stays in input dtype, no f32 upcast of the tile).
    xh = jax.random.normal(kx, (4, 8, 32, 32), dtype=jnp.bfloat16)
    outh = drop_path(xh, drop_prob, True, key=kmask2, min_pallas_elems=0)
    jax.block_until_ready(outh)
    refh = _reference_drop_path(xh, drop_prob, kmask2)
    assert jnp.allclose(outh.astype(jnp.float32), refh.astype(jnp.float32),
                        rtol=2e-2, atol=2e-2)

    print("KERNEL_OK")
</pallas_src>

<mosaic_0001>
module attributes {stable_mosaic.version = 11 : i64} {
  func.func @_drop_path_kernel(%arg0: i32, %arg1: i32, %arg2: memref<2xf32, #tpu.memory_space<smem>>, %arg3: memref<1x8x1024xf32, #tpu.memory_space<vmem>>, %arg4: memref<1x8x1024xf32, #tpu.memory_space<vmem>>) attributes {dimension_semantics = [#tpu.dimension_semantics<parallel>, #tpu.dimension_semantics<parallel>], iteration_bounds = array<i64: 2, 1>, scalar_prefetch = 1 : i64, scratch_operands = 0 : i64, tpu.core_type = #tpu.core_type<tc>, window_params = [{transform_indices = @transform_0, window_bounds = array<i64: 1, 8, 1024>}, {transform_indices = @transform_1, window_bounds = array<i64: 1, 8, 1024>}]} {
    %c0 = arith.constant 0 : index
    %c0_0 = arith.constant 0 : index
    %c0_1 = arith.constant 0 : index
    %0 = vector.load %arg3[%c0, %c0_0, %c0_1] : memref<1x8x1024xf32, #tpu.memory_space<vmem>>, vector<1x8x1024xf32>
    %1 = arith.index_cast %arg0 : i32 to index
    %2 = memref.load %arg2[%1] : memref<2xf32, #tpu.memory_space<smem>>
    %3 = vector.broadcast %2 : f32 to vector<1x8x1024xf32>
    %4 = arith.mulf %0, %3 : vector<1x8x1024xf32>
    %c0_2 = arith.constant 0 : index
    %c0_3 = arith.constant 0 : index
    %c0_4 = arith.constant 0 : index
    %5 = vector.load %arg4[%c0_2, %c0_3, %c0_4] : memref<1x8x1024xf32, #tpu.memory_space<vmem>>, vector<1x8x1024xf32>
    tpu.vector_store %arg4[%c0_2, %c0_3, %c0_4], %4 {strides = array<i32>} : memref<1x8x1024xf32, #tpu.memory_space<vmem>>, vector<1x8x1024xf32>,
    return
  }
  func.func @transform_0(%arg0: i32, %arg1: i32, %arg2: memref<2xf32, #tpu.memory_space<smem>>) -> (i32, i32, i32) {
    %c0_i32 = arith.constant 0 : i32
    %c0_i32_0 = arith.constant 0 : i32
    return %arg0, %arg1, %c0_i32 : i32, i32, i32
  }
  func.func @transform_1(%arg0: i32, %arg1: i32, %arg2: memref<2xf32, #tpu.memory_space<smem>>) -> (i32, i32, i32) {
    %c0_i32 = arith.constant 0 : i32
    %c0_i32_0 = arith.constant 0 : i32
    return %arg0, %arg1, %c0_i32 : i32, i32, i32
  }
}

</mosaic_0001>

<llo_original>
// kernel: tpu_custom_call.1
$region0: #{tpu_custom_call.1}
  #allocation0 [shape = 'u32[]', space=smem, size = 0x4, offset = 0x4, fixed_abs, tag = 'smem constant byte address 0x4 - core index']
  #allocation1 [shape = 'u32[72,128]{1,0:T(1,128)}', space=vmem, size = 0x9000, scoped, tag = 'internal scratch']
  #allocation2 [shape = 's32[1]{0}', space=sflag, size = 0x4, scoped, tag = 'scoped memory for tpu_custom_call.1']
  #allocation3 [shape = 'u8[512]{0}', space=smem, size = 0x200, scoped, tag = 'prefetched SMEM operand 0']
  %s0 = inlined_call_operand.hbm [shape: f32[2], index: 0, kind: input, shape index: {}]
  %s1 = inlined_call_operand.hbm [shape: f32[2,1,1024], index: 1, kind: input, shape index: {}]
  %s2 = inlined_call_operand.hbm [shape: f32[2,1,1024], index: 2, kind: output, shape index: {}]
  %s3 = sld [smem:[#allocation0]]
  $region41: #{tpu_custom_call.1} parent=0
    _
  %s5 = ssub.s32 1, %s3
  %s6 = scalar_select 0, %s5, %s3
  %s8 = sshll.u32 %s0, 4
  %s9 = int_to_ptr.hbm [resolvable:$true] %s8
  %11 = dma.hbm_to_smem %s9, 16, [#allocation3], [#allocation2]
  %13 = dma.done [#allocation2], 16
  %14 = sfence
  $region1: #{tpu_custom_call.1} parent=0
    #allocation4 [shape = 'u8[65536]{0}', space=vmem, size = 0x10000, scoped, tag = 'input window, operand 1']
    #allocation5 [shape = 's32[2]{0}', space=sflag, size = 0x8, scoped, tag = 'scoped memory for tpu_custom_call.1']
    #allocation6 [shape = 's32[2]{0}', space=sflag, size = 0x8, scoped, tag = 'scoped memory for tpu_custom_call.1']
    #allocation7 [shape = 'u8[65536]{0}', space=vmem, size = 0x10000, scoped, tag = 'output window, operand 0']
    %15 = vsyncpa [#allocation5], 0
    %s16 = scalar_lea.sflag [#allocation5], 1
    %17 = vsyncpa %s16, 0
    %18 = vsyncpa [#allocation6], 0
    %s19 = scalar_lea.sflag [#allocation6], 1
    %20 = vsyncpa %s19, 0
    loop: start=0, step=1, limit=4
    $region2: #{tpu_custom_call.1} parent=1 // loop_pre_header
      _
    $region3: #{tpu_custom_call.1} parent=1 // loop_header
      %s22 = sphi 0, %s26
      %p23 = scmp.ge.s32.totalorder %s22, 4
      %s29 = sphi 0, %s41
      %s30 = sphi 0, %s37
      %s31 = sphi 0, %s29
      %s32 = sphi 0, %s30
      %s33 = sphi 0, %s31
      %s34 = sphi 0, %s32
      %s46 = sphi 0, %s48
      %s49 = sphi 0, %s46
      %s50 = sphi 0, %s49
      %s66 = sphi 0, %s50
      %s74 = sphi 0, %s76
      %s77 = sphi 0, %s74
      %s78 = sphi 0, %s77
      %s94 = sphi 0, %s78
    $region4: #{tpu_custom_call.1} parent=1 // loop_header_branch
      %25 = sbr.rel (%p23) target = $region8
    $region5: #{tpu_custom_call.1} parent=1 // loop_body
      %s27 = ssub.s32 %s22, 1
      %s28 = ssub.s32 %s22, 2
      %s35 = sadd.s32 1, %s30
      %p36 = scmp.ge.s32.totalorder %s35, 1
      %s37 = scalar_select %p36, 0, %s35
      %s38 = sadd.s32 1, %s29
      %s39 = scalar_select %p36, %s38, %s29
      %p40 = scmp.ge.s32.totalorder %s39, 2
      %s41 = scalar_select %p40, 0, %s39
      %s42 = ssub.s32 %s29, %s41
      %s43 = ssub.s32 %s30, %s37
      %s44 = sor.u32 %s42, %s43
      %p45 = scmp.eq.s32.totalorder %s44, 0
      %s47 = sadd.s32 %s46, 1
      %s48 = scalar_select %p45, %s46, %s47
      %p51 = pneg %p45
      %p52 = scmp.eq.s32.totalorder %s22, 1
      %p53 = por %p51, %p52
      %p54 = scmp.ne.s32.totalorder %s46, %s49
      %p55 = scmp.eq.s32.totalorder %s22, 0
      %p56 = por %p54, %p55
      %p57 = scmp.ne.s32.totalorder %s46, %s49
      %p58 = scmp.eq.s32.totalorder %s27, 1
      %p59 = por %p57, %p58
      %p60 = scmp.ne.s32.totalorder %s49, %s50
      %p61 = scmp.eq.s32.totalorder %s27, 0
      %p62 = por %p60, %p61
      %p63 = scmp.ne.s32.totalorder %s49, %s50
      %p64 = scmp.eq.s32.totalorder %s28, 1
      %p65 = por %p63, %p64
      %p67 = scmp.ne.s32.totalorder %s50, %s66
      %p68 = scmp.eq.s32.totalorder %s28, 0
      %p69 = por %p67, %p68
      %s70 = ssub.s32 %s29, %s41
      %s71 = ssub.s32 %s30, %s37
      %s72 = sor.u32 %s70, %s71
      %p73 = scmp.eq.s32.totalorder %s72, 0
      %s75 = sadd.s32 %s74, 1
      %s76 = scalar_select %p73, %s74, %s75
      %p79 = pneg %p73
      %p80 = scmp.eq.s32.totalorder %s22, 1
      %p81 = por %p79, %p80
      %p82 = scmp.ne.s32.totalorder %s74, %s77
      %p83 = scmp.eq.s32.totalorder %s22, 0
      %p84 = por %p82, %p83
      %p85 = scmp.ne.s32.totalorder %s74, %s77
      %p86 = scmp.eq.s32.totalorder %s27, 1
      %p87 = por %p85, %p86
      %p88 = scmp.ne.s32.totalorder %s77, %s78
      %p89 = scmp.eq.s32.totalorder %s27, 0
      %p90 = por %p88, %p89
      %p91 = scmp.ne.s32.totalorder %s77, %s78
      %p92 = scmp.eq.s32.totalorder %s28, 1
      %p93 = por %p91, %p92
      %p95 = scmp.ne.s32.totalorder %s78, %s94
      %p96 = scmp.eq.s32.totalorder %s28, 0
      %p97 = por %p95, %p96
      %p98 = scmp.le.s32.totalorder 1, %s22
      %p99 = scmp.lt.s32.totalorder %s22, 3
      %p100 = pnand %p98, %p99
      %p101 = pneg %p100
      // Predicated region
      $region9: #{tpu_custom_call.1} parent=5 // pred_check
        _
      $region10: #{tpu_custom_call.1} parent=5 // pred_check_branch
        %103 = sbr.rel (%p100) target = $region12
      $region11: #{tpu_custom_call.1} parent=5 // pred_region
        %s104 = ssub.s32 %s22, 1
      $region12: #{tpu_custom_call.1} parent=5 // pred_fallthru
        _
      %p105 = scmp.lt.s32.totalorder %s22, 2
      // Predicated region
      $region13: #{tpu_custom_call.1} parent=5 // pred_check
        %p106 = pneg %p105
      $region14: #{tpu_custom_call.1} parent=5 // pred_check_branch
        %108 = sbr.rel (%p106) target = $region16
      $region15: #{tpu_custom_call.1} parent=5 // pred_region
        // Predicated region
        $region17: #{tpu_custom_call.1} parent=15 // pred_check
          %p109 = pneg %p56
        $region18: #{tpu_custom_call.1} parent=15 // pred_check_branch
          %111 = sbr.rel (%p109) target = $region20
        $region19: #{tpu_custom_call.1} parent=15 // pred_region
          %s112 = sand.u32 %s46, 1
          %s113 = scalar_lea.sflag [#allocation5], %s112
          %s114 = sand.u32 %s46, 1
          %s115 = smul.addr %s114, 64
          %s116 = scalar_lea.vmem [#allocation4], %s115
          %s117 = smul.u32 8, %s30
          %s118 = ssub.s32 1, %s117
          %s119 = smul.u32 %s118, 8
          %s120 = ssub.s32 64, %s119
          %s121 = sshll.u32 %s120, 4
          %122 = vsyncadd %s113, %s121
          %p123 = scmp.ne.s32.totalorder 0, %s119
          %s124 = smul.addr %s117, 8
          %s125 = smul.addr %s29, 8
          %s126 = sadd.s32 %s124, %s125
          %s127 = scalar_lea.hbm %s1, %s126
          %s128 = smul.u32 8, %s118
          %s129 = sshll.u32 %s127, 4
          %s130 = int_to_ptr.hbm [resolvable:$true] %s129
          %s131 = sshll.u32 %s116, 4
          %s132 = int_to_ptr.vmem [resolvable:$true] %s131
          %s133 = sshll.u32 %s128, 4
          %137 = dma.hbm_to_vmem [thread:$0]  (%p123), %s130, %s133, %s132, %s113, 128, 128, 8
        $region20: #{tpu_custom_call.1} parent=15 // pred_fallthru
          _
      $region16: #{tpu_custom_call.1} parent=5 // pred_fallthru
        _
      %p138 = scmp.le.s32.totalorder 1, %s22
      %p139 = scmp.lt.s32.totalorder %s22, 3
      %p140 = pnand %p138, %p139
      %p141 = pneg %p140
      // Predicated region
      $region21: #{tpu_custom_call.1} parent=5 // pred_check
        _
      $region22: #{tpu_custom_call.1} parent=5 // pred_check_branch
        %143 = sbr.rel (%p140) target = $region24
      $region23: #{tpu_custom_call.1} parent=5 // pred_region
        %s144 = ssub.s32 %s22, 1
        %s145 = sand.u32 %s49, 1
        %s146 = scalar_lea.sflag [#allocation5], %s145
        %s147 = sand.u32 %s49, 1
        %s148 = smul.addr %s147, 64
        %s149 = scalar_lea.vmem [#allocation4], %s148
        // Predicated region
        $region25: #{tpu_custom_call.1} parent=23 // pred_check
          %p150 = pneg %p62
        $region26: #{tpu_custom_call.1} parent=23 // pred_check_branch
          %152 = sbr.rel (%p150) target = $region28
        $region27: #{tpu_custom_call.1} parent=23 // pred_region
          %154 = dma.done %s146, 1024
        $region28: #{tpu_custom_call.1} parent=23 // pred_fallthru
          _
        %s155 = sand.u32 %s49, 1
        %s156 = scalar_lea.sflag [#allocation5], %s155
        %s157 = sand.u32 %s49, 1
        %s158 = smul.addr %s157, 64
        %s159 = scalar_lea.vmem [#allocation4], %s158
        %p160 = pneg %p62
        %p161 = pneg %p59
        %p162 = pneg %p90
        %p163 = pneg %p87
        %s164 = sand.u32 %s77, 1
        %s165 = scalar_lea.sflag [#allocation6], %s164
        %s166 = sand.u32 %s77, 1
        %s167 = smul.addr %s166, 64
        %s168 = scalar_lea.vmem [#allocation7], %s167
        %s169 = smul.u32 8, %s32
        %s170 = ssub.s32 1, %s169
        %s171 = smul.u32 %s170, 8
        %s172 = smul.u32 8, %s32
        %s173 = ssub.s32 1, %s172
        %s174 = smul.u32 %s173, 8
        %v175 = vld [vmem:[%s149] sm:$0xff]
        %v176 = vld [vmem:[%s149 + $0x8] sm:$0xff]
        %v177 = vld [vmem:[%s149 + $0x10] sm:$0xff]
        %v178 = vld [vmem:[%s149 + $0x18] sm:$0xff]
        %v179 = vld [vmem:[%s149 + $0x20] sm:$0xff]
        %v180 = vld [vmem:[%s149 + $0x28] sm:$0xff]
        %v181 = vld [vmem:[%s149 + $0x30] sm:$0xff]
        %v182 = vld [vmem:[%s149 + $0x38] sm:$0xff]
        %s183 = sld [smem:[#allocation3 + %s31]]
        %v184 = vstv %s183
        %v185 = vmul.f32 %v175, %v184
        %v186 = vmul.f32 %v176, %v184
        %v187 = vmul.f32 %v177, %v184
        %v188 = vmul.f32 %v178, %v184
        %v189 = vmul.f32 %v179, %v184
        %v190 = vmul.f32 %v180, %v184
        %v191 = vmul.f32 %v181, %v184
        %v192 = vmul.f32 %v182, %v184
        %193 = vst [vmem:[%s168] sm:$0xff] %v185
        %194 = vst [vmem:[%s168 + $0x8] sm:$0xff] %v186
        %195 = vst [vmem:[%s168 + $0x10] sm:$0xff] %v187
        %196 = vst [vmem:[%s168 + $0x18] sm:$0xff] %v188
        %197 = vst [vmem:[%s168 + $0x20] sm:$0xff] %v189
        %198 = vst [vmem:[%s168 + $0x28] sm:$0xff] %v190
        %199 = vst [vmem:[%s168 + $0x30] sm:$0xff] %v191
        %200 = vst [vmem:[%s168 + $0x38] sm:$0xff] %v192
        %s201 = sand.u32 %s77, 1
        %s202 = scalar_lea.sflag [#allocation6], %s201
        %s203 = sand.u32 %s77, 1
        %s204 = smul.addr %s203, 64
        %s205 = scalar_lea.vmem [#allocation7], %s204
        // Predicated region
        $region29: #{tpu_custom_call.1} parent=23 // pred_check
          %p206 = pneg %p87
        $region30: #{tpu_custom_call.1} parent=23 // pred_check_branch
          %208 = sbr.rel (%p206) target = $region32
        $region31: #{tpu_custom_call.1} parent=23 // pred_region
          %s209 = smul.u32 8, %s32
          %s210 = ssub.s32 1, %s209
          %s211 = smul.u32 %s210, 8
          %s212 = ssub.s32 64, %s211
          %s213 = sshll.u32 %s212, 4
          %214 = vsyncadd %s202, %s213
          %p215 = scmp.ne.s32.totalorder 0, %s211
          %s216 = smul.addr %s209, 8
          %s217 = smul.addr %s31, 8
          %s218 = sadd.s32 %s216, %s217
          %s219 = scalar_lea.hbm %s2, %s218
          %s220 = smul.u32 8, %s210
          %s221 = sshll.u32 %s205, 4
          %s222 = int_to_ptr.vmem [resolvable:$true] %s221
          %s223 = sshll.u32 %s219, 4
          %s224 = int_to_ptr.hbm [resolvable:$true] %s223
          %s225 = sshll.u32 %s220, 4
          %229 = dma.vmem_to_hbm [thread:$0]  (%p215), %s222, %s225, %s224, %s202, 128, 128, 8
        $region32: #{tpu_custom_call.1} parent=23 // pred_fallthru
          _
      $region24: #{tpu_custom_call.1} parent=5 // pred_fallthru
        _
      %p230 = scmp.le.s32.totalorder 2, %s22
      // Predicated region
      $region33: #{tpu_custom_call.1} parent=5 // pred_check
        %p231 = pneg %p230
      $region34: #{tpu_custom_call.1} parent=5 // pred_check_branch
        %233 = sbr.rel (%p231) target = $region36
      $region35: #{tpu_custom_call.1} parent=5 // pred_region
        %s234 = ssub.s32 %s22, 2
        // Predicated region
        $region37: #{tpu_custom_call.1} parent=35 // pred_check
          %p235 = pneg %p93
        $region38: #{tpu_custom_call.1} parent=35 // pred_check_branch
          %237 = sbr.rel (%p235) target = $region40
        $region39: #{tpu_custom_call.1} parent=35 // pred_region
          %s238 = sand.u32 %s78, 1
          %s239 = scalar_lea.sflag [#allocation6], %s238
          %s240 = sand.u32 %s78, 1
          %s241 = smul.addr %s240, 64
          %s242 = scalar_lea.vmem [#allocation7], %s241
          %244 = dma.done %s239, 1024
        $region40: #{tpu_custom_call.1} parent=35 // pred_fallthru
          _
      $region36: #{tpu_custom_call.1} parent=5 // pred_fallthru
        _
    $region6: #{tpu_custom_call.1} parent=1 // loop_footer
      %s26 = sadd.s32 1, %s22
    $region7: #{tpu_custom_call.1} parent=1 // loop_footer_branch
      %21 = sbr.rel target = $region3
    $region8: #{tpu_custom_call.1} parent=1 // loop_exit
      _
    %245 = vsyncpa [#allocation5], 1
    %s246 = scalar_lea.sflag [#allocation5], 1
    %247 = vsyncpa %s246, 1
    %248 = vsyncpa [#allocation6], 1
    %s249 = scalar_lea.sflag [#allocation6], 1
    %250 = vsyncpa %s249, 1

</llo_original>
